<compile_context>
chip_gen: v5e
topology: v5e:2x2
jax: 0.10.0
libtpu: 0.0.40
codegen_flags: <defaults>
</compile_context>

<pallas_src>
import jax
import jax.numpy as jnp
import numpy as np
from jax.experimental import pallas as pl
from jax.experimental.pallas import tpu as pltpu


def _copy_kernel(x_ref, o_ref):
    # Whole-tile, lane-dense copy: one unmasked load + one unmasked store
    # per vreg, no relayout, no masked vst.
    o_ref[...] = x_ref[...]


def pixel_shuffle(x):
    """x: (N, C, W) with C even  ->  (N, C // 2, 2 * W), same dtype.

    Matches the PyTorch module's forward (which hardcodes a factor of 2
    regardless of the `upscale_factor` passed at construction).
    """
    N, C, W = x.shape
    assert C % 2 == 0, "channel dim must be even"
    C_out, W_out = C // 2, 2 * W

    # --- flatten to a lane-dense 2D slab ------------------------------------
    total = N * C * W
    lane_width = None
    for cand in (1024, 512, 256, 128):
        if total % cand == 0:
            lane_width = cand
            break
    if lane_width is None:
        # Tiny / awkward size: single block equal to the full (1, total) array
        # (legal because block dims equal the full array dims).
        lane_width = total
    rows = total // lane_width
    x2 = x.reshape(rows, lane_width)

    # --- choose block rows: multiple of 8, tile <= ~2 MiB per buffer --------
    itemsize = jnp.dtype(x.dtype).itemsize
    max_rows_by_bytes = max(8, (2 * 1024 * 1024) // (lane_width * itemsize))
    block_rows = min(rows, 512, max_rows_by_bytes)
    if rows >= 8:
        block_rows = max(8, (block_rows // 8) * 8)
    else:
        block_rows = rows  # equals full dim -> legal tiny block

    grid = (pl.cdiv(rows, block_rows),)

    out2 = pl.pallas_call(
        _copy_kernel,
        out_shape=jax.ShapeDtypeStruct((rows, lane_width), x.dtype),
        grid=grid,
        in_specs=[pl.BlockSpec((block_rows, lane_width), lambda i: (i, 0))],
        out_specs=pl.BlockSpec((block_rows, lane_width), lambda i: (i, 0)),
        compiler_params=pltpu.CompilerParams(
            dimension_semantics=("parallel",)),
    )(x2)

    # Metadata-only reshape back to the module's output shape.
    return out2.reshape(N, C_out, W_out)


def _reference(x):
    # Mirrors torch's x.view(n, c // 2, w * 2) on a contiguous tensor.
    N, C, W = x.shape
    return x.reshape(N, C // 2, 2 * W)


if __name__ == "__main__":
    # Small shapes consistent with the module's 3D (batch, channels, width) input.
    N, C, W = 2, 4, 16
    x = jax.random.normal(jax.random.PRNGKey(0), (N, C, W), jnp.float32)

    out = jax.block_until_ready(pixel_shuffle(x))
    ref = jax.block_until_ready(_reference(x))

    assert out.shape == (N, C // 2, 2 * W), out.shape
    np.testing.assert_array_equal(np.asarray(out), np.asarray(ref))

    print("KERNEL_OK")
</pallas_src>

<mosaic_0001>
module attributes {stable_mosaic.version = 11 : i64} {
  func.func @_copy_kernel(%arg0: i32, %arg1: memref<1x128xf32, #tpu.memory_space<vmem>>, %arg2: memref<1x128xf32, #tpu.memory_space<vmem>>) attributes {dimension_semantics = [#tpu.dimension_semantics<parallel>], iteration_bounds = array<i64: 1>, scalar_prefetch = 0 : i64, scratch_operands = 0 : i64, tpu.core_type = #tpu.core_type<tc>, window_params = [{transform_indices = @transform_0, window_bounds = array<i64: 1, 128>}, {transform_indices = @transform_1, window_bounds = array<i64: 1, 128>}]} {
    %c0 = arith.constant 0 : index
    %c0_0 = arith.constant 0 : index
    %0 = vector.load %arg1[%c0, %c0_0] : memref<1x128xf32, #tpu.memory_space<vmem>>, vector<1x128xf32>
    %c0_1 = arith.constant 0 : index
    %c0_2 = arith.constant 0 : index
    %1 = vector.load %arg2[%c0_1, %c0_2] : memref<1x128xf32, #tpu.memory_space<vmem>>, vector<1x128xf32>
    tpu.vector_store %arg2[%c0_1, %c0_2], %0 {strides = array<i32>} : memref<1x128xf32, #tpu.memory_space<vmem>>, vector<1x128xf32>,
    return
  }
  func.func @transform_0(%arg0: i32) -> (i32, i32) {
    %c0_i32 = arith.constant 0 : i32
    %c0_i32_0 = arith.constant 0 : i32
    return %arg0, %c0_i32 : i32, i32
  }
  func.func @transform_1(%arg0: i32) -> (i32, i32) {
    %c0_i32 = arith.constant 0 : i32
    %c0_i32_0 = arith.constant 0 : i32
    return %arg0, %c0_i32 : i32, i32
  }
}

</mosaic_0001>

<llo_original>
// kernel: tpu_custom_call.1
$region0: #{tpu_custom_call.1}
  #allocation0 [shape = 'u32[]', space=smem, size = 0x4, offset = 0x4, fixed_abs, tag = 'smem constant byte address 0x4 - core index']
  #allocation1 [shape = 'u32[72,128]{1,0:T(1,128)}', space=vmem, size = 0x9000, scoped, tag = 'internal scratch']
  %s0 = inlined_call_operand.hbm [shape: f32[1,128], index: 0, kind: input, shape index: {}]
  %s1 = inlined_call_operand.hbm [shape: f32[1,128], index: 1, kind: output, shape index: {}]
  %s2 = sld [smem:[#allocation0]]
  $region18: #{tpu_custom_call.1} parent=0
    _
  %s4 = ssub.s32 1, %s2
  %s5 = scalar_select 0, %s4, %s2
  $region1: #{tpu_custom_call.1} parent=0
    #allocation2 [shape = 'u8[512]{0}', space=vmem, size = 0x400, scoped, tag = 'input window, operand 0, single buffered']
    #allocation3 [shape = 's32[1]{0}', space=sflag, size = 0x4, scoped, tag = 'scoped memory for tpu_custom_call.1']
    #allocation4 [shape = 's32[1]{0}', space=sflag, size = 0x4, scoped, tag = 'scoped memory for tpu_custom_call.1']
    #allocation5 [shape = 'u8[512]{0}', space=vmem, size = 0x400, scoped, tag = 'output window, operand 0, single buffered']
    %6 = vsyncpa [#allocation3], 0
    %7 = vsyncpa [#allocation4], 0
    // Predicated region
    $region2: #{tpu_custom_call.1} parent=1 // pred_check
      _
    $region3: #{tpu_custom_call.1} parent=1 // pred_check_branch
      %9 = sbr.rel (0) target = $region5
    $region4: #{tpu_custom_call.1} parent=1 // pred_region
      %11 = vsyncadd [#allocation3], 0
      %s13 = sshll.u32 %s0, 4
      %s14 = int_to_ptr.hbm [resolvable:$true] %s13
      %s15 = sshll.u32 [#allocation2], 4
      %s16 = int_to_ptr.vmem [resolvable:$true] %s15
      %18 = dma.hbm_to_vmem [thread:$0]  %s14, 16, %s16, [#allocation3]
    $region5: #{tpu_custom_call.1} parent=1 // pred_fallthru
      _
    // Predicated region
    $region6: #{tpu_custom_call.1} parent=1 // pred_check
      _
    $region7: #{tpu_custom_call.1} parent=1 // pred_check_branch
      %20 = sbr.rel (0) target = $region9
    $region8: #{tpu_custom_call.1} parent=1 // pred_region
      %22 = dma.done [#allocation3], 16
    $region9: #{tpu_custom_call.1} parent=1 // pred_fallthru
      _
    %v23 = vld [vmem:[#allocation2] sm:$0x1]
    %24 = vst [vmem:[#allocation5] sm:$0x1] %v23
    // Predicated region
    $region10: #{tpu_custom_call.1} parent=1 // pred_check
      _
    $region11: #{tpu_custom_call.1} parent=1 // pred_check_branch
      %26 = sbr.rel (0) target = $region13
    $region12: #{tpu_custom_call.1} parent=1 // pred_region
      %28 = vsyncadd [#allocation4], 0
      %s30 = sshll.u32 [#allocation5], 4
      %s31 = int_to_ptr.vmem [resolvable:$true] %s30
      %s32 = sshll.u32 %s1, 4
      %s33 = int_to_ptr.hbm [resolvable:$true] %s32
      %35 = dma.vmem_to_hbm [thread:$0]  %s31, 16, %s33, [#allocation4]
    $region13: #{tpu_custom_call.1} parent=1 // pred_fallthru
      _
    // Predicated region
    $region14: #{tpu_custom_call.1} parent=1 // pred_check
      _
    $region15: #{tpu_custom_call.1} parent=1 // pred_check_branch
      %37 = sbr.rel (0) target = $region17
    $region16: #{tpu_custom_call.1} parent=1 // pred_region
      %39 = dma.done [#allocation4], 16
    $region17: #{tpu_custom_call.1} parent=1 // pred_fallthru
      _
    %40 = vsyncpa [#allocation3], 1
    %41 = vsyncpa [#allocation4], 1

</llo_original>
